<compile_context>
chip_gen: v6e
topology: v6e:2x2x1
jax: 0.10.0
libtpu: 0.0.40
codegen_flags: <defaults>
</compile_context>

<pallas_src>
import jax
import jax.numpy as jnp
from jax.experimental import pallas as pl
from jax.experimental.pallas import tpu as pltpu

EPS = 1e-5          # nn.BatchNorm2d default eps
LANE = 128
SUBLANE = 8
DEFAULT_TILE_M = 256


def _round_up(a, b):
    return ((a + b - 1) // b) * b


# ---------------------------------------------------------------------------
# Pallas kernels
# ---------------------------------------------------------------------------
def conv_stats_kernel(xcol_ref, w_ref, y_ref, sum_ref, ssq_ref):
    """One M-tile of the im2col matmul; accumulates per-channel sum / sumsq."""
    y = jnp.dot(xcol_ref[...], w_ref[...], preferred_element_type=jnp.float32)
    y_ref[...] = y

    @pl.when(pl.program_id(0) == 0)
    def _():
        sum_ref[...] = jnp.zeros_like(sum_ref)
        ssq_ref[...] = jnp.zeros_like(ssq_ref)

    sum_ref[...] += jnp.sum(y, axis=0, keepdims=True)
    ssq_ref[...] += jnp.sum(y * y, axis=0, keepdims=True)


def _make_bn_relu_kernel(inv_count):
    def kernel(y_ref, s_ref, q_ref, g_ref, b_ref, o_ref):
        mean = s_ref[...] * inv_count
        var = q_ref[...] * inv_count - mean * mean
        inv_std = jax.lax.rsqrt(var + EPS)
        yn = (y_ref[...] - mean) * inv_std * g_ref[...] + b_ref[...]
        o_ref[...] = jnp.maximum(yn, 0.0).astype(o_ref.dtype)
    return kernel


def _make_bn_add_relu_conv3_kernel(inv_count):
    def kernel(y_ref, s_ref, q_ref, g_ref, b_ref,
               xsc_ref, w3_ref, b3_ref, o_ref):
        mean = s_ref[...] * inv_count
        var = q_ref[...] * inv_count - mean * mean
        inv_std = jax.lax.rsqrt(var + EPS)
        yn = (y_ref[...] - mean) * inv_std * g_ref[...] + b_ref[...]
        sc = jnp.dot(xsc_ref[...], w3_ref[...],
                     preferred_element_type=jnp.float32) + b3_ref[...]
        o_ref[...] = jnp.maximum(yn + sc, 0.0).astype(o_ref.dtype)
    return kernel


def _make_bn_add_relu_identity_kernel(inv_count):
    def kernel(y_ref, s_ref, q_ref, g_ref, b_ref, xid_ref, o_ref):
        mean = s_ref[...] * inv_count
        var = q_ref[...] * inv_count - mean * mean
        inv_std = jax.lax.rsqrt(var + EPS)
        yn = (y_ref[...] - mean) * inv_std * g_ref[...] + b_ref[...]
        o_ref[...] = jnp.maximum(yn + xid_ref[...], 0.0).astype(o_ref.dtype)
    return kernel


# ---------------------------------------------------------------------------
# pallas_call wrappers
# ---------------------------------------------------------------------------
def _conv_stats(xcol_p, w_p, tile_m):
    Mp, Kp = xcol_p.shape
    Cop = w_p.shape[1]
    grid = (Mp // tile_m,)
    return pl.pallas_call(
        conv_stats_kernel,
        out_shape=(jax.ShapeDtypeStruct((Mp, Cop), jnp.float32),
                   jax.ShapeDtypeStruct((1, Cop), jnp.float32),
                   jax.ShapeDtypeStruct((1, Cop), jnp.float32)),
        grid=grid,
        in_specs=[
            pl.BlockSpec((tile_m, Kp), lambda i: (i, 0)),
            pl.BlockSpec((Kp, Cop), lambda i: (0, 0)),
        ],
        out_specs=[
            pl.BlockSpec((tile_m, Cop), lambda i: (i, 0)),
            pl.BlockSpec((1, Cop), lambda i: (0, 0)),
            pl.BlockSpec((1, Cop), lambda i: (0, 0)),
        ],
        compiler_params=pltpu.CompilerParams(
            dimension_semantics=("arbitrary",)),   # stats reduction over M tiles
    )(xcol_p, w_p)


def _bn_relu(y, s, q, gamma, beta, count, tile_m, out_dtype):
    Mp, Cop = y.shape
    kernel = _make_bn_relu_kernel(1.0 / float(count))
    return pl.pallas_call(
        kernel,
        out_shape=jax.ShapeDtypeStruct((Mp, Cop), out_dtype),
        grid=(Mp // tile_m,),
        in_specs=[
            pl.BlockSpec((tile_m, Cop), lambda i: (i, 0)),
            pl.BlockSpec((1, Cop), lambda i: (0, 0)),
            pl.BlockSpec((1, Cop), lambda i: (0, 0)),
            pl.BlockSpec((1, Cop), lambda i: (0, 0)),
            pl.BlockSpec((1, Cop), lambda i: (0, 0)),
        ],
        out_specs=pl.BlockSpec((tile_m, Cop), lambda i: (i, 0)),
        compiler_params=pltpu.CompilerParams(
            dimension_semantics=("parallel",)),
    )(y, s, q, gamma, beta)


def _bn_add_relu_conv3(y, s, q, gamma, beta, xsc, w3, b3, count, tile_m):
    Mp, Cop = y.shape
    Ksc = xsc.shape[1]
    kernel = _make_bn_add_relu_conv3_kernel(1.0 / float(count))
    return pl.pallas_call(
        kernel,
        out_shape=jax.ShapeDtypeStruct((Mp, Cop), jnp.float32),
        grid=(Mp // tile_m,),
        in_specs=[
            pl.BlockSpec((tile_m, Cop), lambda i: (i, 0)),
            pl.BlockSpec((1, Cop), lambda i: (0, 0)),
            pl.BlockSpec((1, Cop), lambda i: (0, 0)),
            pl.BlockSpec((1, Cop), lambda i: (0, 0)),
            pl.BlockSpec((1, Cop), lambda i: (0, 0)),
            pl.BlockSpec((tile_m, Ksc), lambda i: (i, 0)),
            pl.BlockSpec((Ksc, Cop), lambda i: (0, 0)),
            pl.BlockSpec((1, Cop), lambda i: (0, 0)),
        ],
        out_specs=pl.BlockSpec((tile_m, Cop), lambda i: (i, 0)),
        compiler_params=pltpu.CompilerParams(
            dimension_semantics=("parallel",)),
    )(y, s, q, gamma, beta, xsc, w3, b3)


def _bn_add_relu_identity(y, s, q, gamma, beta, xid, count, tile_m):
    Mp, Cop = y.shape
    kernel = _make_bn_add_relu_identity_kernel(1.0 / float(count))
    return pl.pallas_call(
        kernel,
        out_shape=jax.ShapeDtypeStruct((Mp, Cop), jnp.float32),
        grid=(Mp // tile_m,),
        in_specs=[
            pl.BlockSpec((tile_m, Cop), lambda i: (i, 0)),
            pl.BlockSpec((1, Cop), lambda i: (0, 0)),
            pl.BlockSpec((1, Cop), lambda i: (0, 0)),
            pl.BlockSpec((1, Cop), lambda i: (0, 0)),
            pl.BlockSpec((1, Cop), lambda i: (0, 0)),
            pl.BlockSpec((tile_m, Cop), lambda i: (i, 0)),
        ],
        out_specs=pl.BlockSpec((tile_m, Cop), lambda i: (i, 0)),
        compiler_params=pltpu.CompilerParams(
            dimension_semantics=("parallel",)),
    )(y, s, q, gamma, beta, xid)


# ---------------------------------------------------------------------------
# JAX glue: im2col window extraction + padding (pure indexing / reshapes)
# ---------------------------------------------------------------------------
def _im2col(x_nhwc, ksize, stride, padding):
    N, H, W, C = x_nhwc.shape
    Ho = (H + 2 * padding - ksize) // stride + 1
    Wo = (W + 2 * padding - ksize) // stride + 1
    xp = jnp.pad(x_nhwc, ((0, 0), (padding, padding), (padding, padding), (0, 0)))
    cols = []
    for dh in range(ksize):
        for dw in range(ksize):
            cols.append(xp[:, dh:dh + stride * (Ho - 1) + 1:stride,
                           dw:dw + stride * (Wo - 1) + 1:stride, :])
    patches = jnp.concatenate(cols, axis=-1)             # (N, Ho, Wo, K*K*C)
    return patches.reshape(N * Ho * Wo, ksize * ksize * C), (Ho, Wo)


def _pad2(a, rows, cols, dtype):
    r, c = a.shape
    return jnp.pad(a, ((0, rows - r), (0, cols - c))).astype(dtype)


def _pad_vec(v, cols, dtype=jnp.float32):
    return jnp.pad(v, (0, cols - v.shape[0])).astype(dtype).reshape(1, cols)


# ---------------------------------------------------------------------------
# Residual.forward
# ---------------------------------------------------------------------------
def residual_forward(x_nchw, params, *, stride=1, use_1x1conv=False,
                     tile_m=DEFAULT_TILE_M):
    x = jnp.transpose(x_nchw, (0, 2, 3, 1)).astype(jnp.float32)  # NCHW -> NHWC
    N, H, W, Ci = x.shape
    Co = params["w1"].shape[0]
    Cop = _round_up(Co, LANE)

    # ---- conv1 + bn1 + relu -------------------------------------------------
    xcol1, (Ho, Wo) = _im2col(x, 3, stride, 1)
    M = N * Ho * Wo
    tm = min(tile_m, _round_up(M, SUBLANE))
    Mp = _round_up(M, tm)

    K1 = 9 * Ci
    Kp1 = _round_up(K1, LANE)
    xcol1_p = _pad2(xcol1, Mp, Kp1, jnp.bfloat16)
    w1m = jnp.transpose(params["w1"], (2, 3, 1, 0)).reshape(K1, Co)
    w1_p = _pad2(w1m, Kp1, Cop, jnp.bfloat16)
    g1 = _pad_vec(params["gamma1"], Cop)
    be1 = _pad_vec(params["beta1"], Cop)
    # conv bias b1 intentionally dropped: training-mode BN mean-subtraction
    # cancels a per-channel constant exactly.

    y1raw, s1, q1 = _conv_stats(xcol1_p, w1_p, tm)
    y1n = _bn_relu(y1raw, s1, q1, g1, be1, M, tm, jnp.bfloat16)

    # ---- conv2 + bn2 --------------------------------------------------------
    y1_nhwc = y1n[:M, :Co].reshape(N, Ho, Wo, Co)
    xcol2, _ = _im2col(y1_nhwc, 3, 1, 1)                 # stride 1, pad 1
    K2 = 9 * Co
    Kp2 = _round_up(K2, LANE)
    xcol2_p = _pad2(xcol2, Mp, Kp2, jnp.bfloat16)
    w2m = jnp.transpose(params["w2"], (2, 3, 1, 0)).reshape(K2, Co)
    w2_p = _pad2(w2m, Kp2, Cop, jnp.bfloat16)
    g2 = _pad_vec(params["gamma2"], Cop)
    be2 = _pad_vec(params["beta2"], Cop)

    y2raw, s2, q2 = _conv_stats(xcol2_p, w2_p, tm)

    # ---- shortcut + add + relu ----------------------------------------------
    if use_1x1conv:
        xs = x[:, 0:stride * (Ho - 1) + 1:stride,
               0:stride * (Wo - 1) + 1:stride, :].reshape(M, Ci)
        Kscp = _round_up(Ci, LANE)
        xsc_p = _pad2(xs, Mp, Kscp, jnp.bfloat16)
        w3m = params["w3"][:, :, 0, 0].T                 # (Ci, Co)
        w3_p = _pad2(w3m, Kscp, Cop, jnp.bfloat16)
        b3_p = _pad_vec(params["b3"], Cop)
        out = _bn_add_relu_conv3(y2raw, s2, q2, g2, be2,
                                 xsc_p, w3_p, b3_p, M, tm)
    else:
        # Identity shortcut: PyTorch would require Ci == Co and stride == 1.
        assert Ci == Co and stride == 1, "identity shortcut needs Ci==Co, stride==1"
        xid_p = _pad2(x.reshape(M, Ci), Mp, Cop, jnp.float32)
        out = _bn_add_relu_identity(y2raw, s2, q2, g2, be2, xid_p, M, tm)

    out = out[:M, :Co].reshape(N, Ho, Wo, Co)
    return jnp.transpose(out, (0, 3, 1, 2))              # back to NCHW


# ---------------------------------------------------------------------------
# Pure-JAX reference (mirrors the PyTorch forward, training-mode BN)
# ---------------------------------------------------------------------------
def residual_ref(x_nchw, params, *, stride=1, use_1x1conv=False):
    def conv(x, w, b, s, p):
        y = jax.lax.conv_general_dilated(
            x, w, window_strides=(s, s), padding=[(p, p), (p, p)],
            dimension_numbers=("NCHW", "OIHW", "NCHW"))
        return y + b[None, :, None, None]

    def bn(x, g, bta):
        m = jnp.mean(x, axis=(0, 2, 3), keepdims=True)
        v = jnp.mean((x - m) ** 2, axis=(0, 2, 3), keepdims=True)
        return (x - m) * jax.lax.rsqrt(v + EPS) * g[None, :, None, None] \
            + bta[None, :, None, None]

    y = jax.nn.relu(bn(conv(x_nchw, params["w1"], params["b1"], stride, 1),
                       params["gamma1"], params["beta1"]))
    y = bn(conv(y, params["w2"], params["b2"], 1, 1),
           params["gamma2"], params["beta2"])
    sc = conv(x_nchw, params["w3"], params["b3"], stride, 0) if use_1x1conv else x_nchw
    return jax.nn.relu(y + sc)


def _make_params(key, Ci, Co, use_1x1conv):
    ks = jax.random.split(key, 10)
    p = {
        "w1": 0.1 * jax.random.normal(ks[0], (Co, Ci, 3, 3), jnp.float32),
        "b1": 0.05 * jax.random.normal(ks[1], (Co,), jnp.float32),
        "w2": 0.1 * jax.random.normal(ks[2], (Co, Co, 3, 3), jnp.float32),
        "b2": 0.05 * jax.random.normal(ks[3], (Co,), jnp.float32),
        "gamma1": 1.0 + 0.1 * jax.random.normal(ks[6], (Co,), jnp.float32),
        "beta1": 0.1 * jax.random.normal(ks[7], (Co,), jnp.float32),
        "gamma2": 1.0 + 0.1 * jax.random.normal(ks[8], (Co,), jnp.float32),
        "beta2": 0.1 * jax.random.normal(ks[9], (Co,), jnp.float32),
    }
    if use_1x1conv:
        p["w3"] = 0.1 * jax.random.normal(ks[4], (Co, Ci, 1, 1), jnp.float32)
        p["b3"] = 0.05 * jax.random.normal(ks[5], (Co,), jnp.float32)
    return p


# ---------------------------------------------------------------------------
if __name__ == "__main__":
    key = jax.random.PRNGKey(0)

    # Case 1: Residual(4, 8, use_1x1conv=True, stride=2)  — projection shortcut
    N, Ci, H, W, Co, stride = 2, 4, 16, 16, 8, 2
    params = _make_params(key, Ci, Co, use_1x1conv=True)
    x = jax.random.normal(jax.random.PRNGKey(42), (N, Ci, H, W), jnp.float32)

    out = jax.block_until_ready(
        residual_forward(x, params, stride=stride, use_1x1conv=True))
    ref = jax.block_until_ready(
        residual_ref(x, params, stride=stride, use_1x1conv=True))
    assert out.shape == ref.shape, (out.shape, ref.shape)
    err1 = float(jnp.max(jnp.abs(out - ref)))
    # bf16 MXU operands -> tolerance wider than a pure-f32 comparison.
    assert err1 < 5e-2, f"case1 max abs error too large: {err1}"

    # Case 2: Residual(8, 8) — identity shortcut, multiple M tiles
    N2, C2, H2, W2 = 2, 8, 16, 16
    params2 = _make_params(jax.random.PRNGKey(1), C2, C2, use_1x1conv=False)
    x2 = jax.random.normal(jax.random.PRNGKey(7), (N2, C2, H2, W2), jnp.float32)

    out2 = jax.block_until_ready(
        residual_forward(x2, params2, stride=1, use_1x1conv=False))
    ref2 = jax.block_until_ready(
        residual_ref(x2, params2, stride=1, use_1x1conv=False))
    assert out2.shape == ref2.shape, (out2.shape, ref2.shape)
    err2 = float(jnp.max(jnp.abs(out2 - ref2)))
    assert err2 < 5e-2, f"case2 max abs error too large: {err2}"

    print("KERNEL_OK")
</pallas_src>

<mosaic_0001>
module attributes {stable_mosaic.version = 11 : i64} {
  func.func @conv_stats_kernel(%arg0: i32, %arg1: memref<128x128xbf16, #tpu.memory_space<vmem>>, %arg2: memref<128x128xbf16, #tpu.memory_space<vmem>>, %arg3: memref<128x128xf32, #tpu.memory_space<vmem>>, %arg4: memref<1x128xf32, #tpu.memory_space<vmem>>, %arg5: memref<1x128xf32, #tpu.memory_space<vmem>>) attributes {dimension_semantics = [#tpu.dimension_semantics<arbitrary>], iteration_bounds = array<i64: 1>, scalar_prefetch = 0 : i64, scratch_operands = 0 : i64, tpu.core_type = #tpu.core_type<tc>, window_params = [{transform_indices = @transform_0, window_bounds = array<i64: 128, 128>}, {pipeline_mode = #tpu.pipeline_mode<synchronous>, transform_indices = @transform_1, window_bounds = array<i64: 128, 128>}, {transform_indices = @transform_2, window_bounds = array<i64: 128, 128>}, {pipeline_mode = #tpu.pipeline_mode<synchronous>, transform_indices = @transform_3, window_bounds = array<i64: 1, 128>}, {pipeline_mode = #tpu.pipeline_mode<synchronous>, transform_indices = @transform_4, window_bounds = array<i64: 1, 128>}]} {
    %c0 = arith.constant 0 : index
    %c0_0 = arith.constant 0 : index
    %0 = vector.load %arg1[%c0, %c0_0] : memref<128x128xbf16, #tpu.memory_space<vmem>>, vector<128x128xbf16>
    %c0_1 = arith.constant 0 : index
    %c0_2 = arith.constant 0 : index
    %1 = vector.load %arg2[%c0_1, %c0_2] : memref<128x128xbf16, #tpu.memory_space<vmem>>, vector<128x128xbf16>
    %cst = arith.constant dense<0.000000e+00> : vector<128x128xf32>
    %2 = tpu.matmul %0, %1, %cst {dimension_numbers = #tpu.dot_dimension_numbers<[1], [0], [0], [1], [0, 0, 1, 1], [], []>} : vector<128x128xbf16>, vector<128x128xbf16>, vector<128x128xf32> -> vector<128x128xf32>
    %c0_3 = arith.constant 0 : index
    %c0_4 = arith.constant 0 : index
    %3 = vector.load %arg3[%c0_3, %c0_4] : memref<128x128xf32, #tpu.memory_space<vmem>>, vector<128x128xf32>
    tpu.vector_store %arg3[%c0_3, %c0_4], %2 {strides = array<i32>} : memref<128x128xf32, #tpu.memory_space<vmem>>, vector<128x128xf32>,
    %c0_i32 = arith.constant 0 : i32
    %4 = arith.cmpi eq, %arg0, %c0_i32 : i32
    %5 = arith.extui %4 : i1 to i32
    %c0_i32_5 = arith.constant 0 : i32
    %6 = arith.cmpi ne, %5, %c0_i32_5 : i32
    scf.if %6 {
      %cst_16 = arith.constant 0.000000e+00 : f32
      %18 = vector.broadcast %cst_16 : f32 to vector<1x128xf32>
      %c0_17 = arith.constant 0 : index
      %c0_18 = arith.constant 0 : index
      %19 = vector.load %arg4[%c0_17, %c0_18] : memref<1x128xf32, #tpu.memory_space<vmem>>, vector<1x128xf32>
      tpu.vector_store %arg4[%c0_17, %c0_18], %18 {strides = array<i32>} : memref<1x128xf32, #tpu.memory_space<vmem>>, vector<1x128xf32>,
      %cst_19 = arith.constant 0.000000e+00 : f32
      %20 = vector.broadcast %cst_19 : f32 to vector<1x128xf32>
      %c0_20 = arith.constant 0 : index
      %c0_21 = arith.constant 0 : index
      %21 = vector.load %arg5[%c0_20, %c0_21] : memref<1x128xf32, #tpu.memory_space<vmem>>, vector<1x128xf32>
      tpu.vector_store %arg5[%c0_20, %c0_21], %20 {strides = array<i32>} : memref<1x128xf32, #tpu.memory_space<vmem>>, vector<1x128xf32>,
    } else {
    }
    %c0_6 = arith.constant 0 : index
    %c0_7 = arith.constant 0 : index
    %7 = vector.load %arg4[%c0_6, %c0_7] : memref<1x128xf32, #tpu.memory_space<vmem>>, vector<1x128xf32>
    %cst_8 = arith.constant dense<0.000000e+00> : vector<128xf32>
    %8 = vector.multi_reduction <add>, %2, %cst_8 [0] : vector<128x128xf32> to vector<128xf32>
    %9 = vector.shape_cast %8 : vector<128xf32> to vector<1x128xf32>
    %10 = arith.addf %7, %9 : vector<1x128xf32>
    %c0_9 = arith.constant 0 : index
    %c0_10 = arith.constant 0 : index
    %11 = vector.load %arg4[%c0_9, %c0_10] : memref<1x128xf32, #tpu.memory_space<vmem>>, vector<1x128xf32>
    tpu.vector_store %arg4[%c0_9, %c0_10], %10 {strides = array<i32>} : memref<1x128xf32, #tpu.memory_space<vmem>>, vector<1x128xf32>,
    %c0_11 = arith.constant 0 : index
    %c0_12 = arith.constant 0 : index
    %12 = vector.load %arg5[%c0_11, %c0_12] : memref<1x128xf32, #tpu.memory_space<vmem>>, vector<1x128xf32>
    %13 = arith.mulf %2, %2 : vector<128x128xf32>
    %cst_13 = arith.constant dense<0.000000e+00> : vector<128xf32>
    %14 = vector.multi_reduction <add>, %13, %cst_13 [0] : vector<128x128xf32> to vector<128xf32>
    %15 = vector.shape_cast %14 : vector<128xf32> to vector<1x128xf32>
    %16 = arith.addf %12, %15 : vector<1x128xf32>
    %c0_14 = arith.constant 0 : index
    %c0_15 = arith.constant 0 : index
    %17 = vector.load %arg5[%c0_14, %c0_15] : memref<1x128xf32, #tpu.memory_space<vmem>>, vector<1x128xf32>
    tpu.vector_store %arg5[%c0_14, %c0_15], %16 {strides = array<i32>} : memref<1x128xf32, #tpu.memory_space<vmem>>, vector<1x128xf32>,
    return
  }
  func.func @transform_0(%arg0: i32) -> (i32, i32) {
    %c0_i32 = arith.constant 0 : i32
    %c0_i32_0 = arith.constant 0 : i32
    return %arg0, %c0_i32 : i32, i32
  }
  func.func @transform_1(%arg0: i32) -> (i32, i32) {
    %c0_i32 = arith.constant 0 : i32
    %c0_i32_0 = arith.constant 0 : i32
    %c0_i32_1 = arith.constant 0 : i32
    return %c0_i32, %c0_i32_0 : i32, i32
  }
  func.func @transform_2(%arg0: i32) -> (i32, i32) {
    %c0_i32 = arith.constant 0 : i32
    %c0_i32_0 = arith.constant 0 : i32
    return %arg0, %c0_i32 : i32, i32
  }
  func.func @transform_3(%arg0: i32) -> (i32, i32) {
    %c0_i32 = arith.constant 0 : i32
    %c0_i32_0 = arith.constant 0 : i32
    %c0_i32_1 = arith.constant 0 : i32
    return %c0_i32, %c0_i32_0 : i32, i32
  }
  func.func @transform_4(%arg0: i32) -> (i32, i32) {
    %c0_i32 = arith.constant 0 : i32
    %c0_i32_0 = arith.constant 0 : i32
    %c0_i32_1 = arith.constant 0 : i32
    return %c0_i32, %c0_i32_0 : i32, i32
  }
}

</mosaic_0001>

<llo_original>
// kernel: tpu_custom_call.1
$region0: #{tpu_custom_call.1}
  #allocation0 [shape = 'u32[]', space=smem, size = 0x4, offset = 0x4, fixed_abs, tag = 'smem constant byte address 0x4 - core index']
  #allocation1 [shape = 'u32[144,128]{1,0:T(1,128)}', space=vmem, size = 0x12000, scoped, tag = 'internal scratch']
  %s0 = inlined_call_operand.hbm [shape: bf16[128,128], index: 0, kind: input, shape index: {}]
  %s1 = inlined_call_operand.hbm [shape: bf16[128,128], index: 1, kind: input, shape index: {}]
  %s2 = inlined_call_operand.hbm [shape: f32[128,128], index: 2, kind: output, shape index: {0}]
  %s3 = inlined_call_operand.hbm [shape: f32[1,128], index: 3, kind: output, shape index: {1}]
  %s4 = inlined_call_operand.hbm [shape: f32[1,128], index: 4, kind: output, shape index: {2}]
  %5 = xla_tuple %s2, %s3, %s4
  %s6 = sld [smem:[#allocation0]]
  $region46: #{tpu_custom_call.1} parent=0
    _
  %s8 = ssub.s32 1, %s6
  %s9 = scalar_select 0, %s8, %s6
  $region1: #{tpu_custom_call.1} parent=0
    #allocation2 [shape = 'u8[32768]{0}', space=vmem, size = 0x8000, scoped, tag = 'input window, operand 0, single buffered']
    #allocation3 [shape = 's32[1]{0}', space=sflag, size = 0x4, scoped, tag = 'scoped memory for tpu_custom_call.1']
    #allocation4 [shape = 's32[1]{0}', space=sflag, size = 0x4, scoped, tag = 'scoped memory for tpu_custom_call.1']
    #allocation5 [shape = 'u8[32768]{0}', space=vmem, size = 0x8000, scoped, tag = 'input window, operand 1, single buffered']
    #allocation6 [shape = 's32[1]{0}', space=sflag, size = 0x4, scoped, tag = 'scoped memory for tpu_custom_call.1']
    #allocation7 [shape = 'u8[65536]{0}', space=vmem, size = 0x10000, scoped, tag = 'output window, operand 0, single buffered']
    #allocation8 [shape = 'u8[512]{0}', space=vmem, size = 0x400, scoped, tag = 'output window, operand 1, single buffered']
    #allocation9 [shape = 's32[1]{0}', space=sflag, size = 0x4, scoped, tag = 'scoped memory for tpu_custom_call.1']
    #allocation10 [shape = 'u8[512]{0}', space=vmem, size = 0x400, scoped, tag = 'output window, operand 2, single buffered']
    %10 = vsyncpa [#allocation3], 0
    %11 = vsyncpa [#allocation6], 0
    %12 = vsyncpa [#allocation4], 0
    %13 = vsyncpa [#allocation9], 0
    // Predicated region
    $region2: #{tpu_custom_call.1} parent=1 // pred_check
      _
    $region3: #{tpu_custom_call.1} parent=1 // pred_check_branch
      %15 = sbr.rel (0) target = $region5
    $region4: #{tpu_custom_call.1} parent=1 // pred_region
      %s17 = ssub.s32 1024, 1024
      %18 = vsyncadd [#allocation3], %s17
      %s19 = sshll.u32 [#allocation2], 4
      %s20 = int_to_ptr.vmem [resolvable:$true] %s19
      %25 = dma.hbm_to_vmem [thread:$0]  %s0, 1024, %s20, [#allocation3], 64, 64, 4
    $region5: #{tpu_custom_call.1} parent=1 // pred_fallthru
      _
    // Predicated region
    $region6: #{tpu_custom_call.1} parent=1 // pred_check
      _
    $region7: #{tpu_custom_call.1} parent=1 // pred_check_branch
      %27 = sbr.rel (0) target = $region9
    $region8: #{tpu_custom_call.1} parent=1 // pred_region
      %s29 = ssub.s32 1024, 1024
      %30 = vsyncadd [#allocation6], %s29
      %s31 = sshll.u32 [#allocation5], 4
      %s32 = int_to_ptr.vmem [resolvable:$true] %s31
      %37 = dma.hbm_to_vmem [thread:$0]  %s1, 1024, %s32, [#allocation6], 64, 64, 4
    $region9: #{tpu_custom_call.1} parent=1 // pred_fallthru
      _
    // Predicated region
    $region10: #{tpu_custom_call.1} parent=1 // pred_check
      _
    $region11: #{tpu_custom_call.1} parent=1 // pred_check_branch
      %39 = sbr.rel (0) target = $region13
    $region12: #{tpu_custom_call.1} parent=1 // pred_region
      %40 = dma.done [#allocation3], 1024
    $region13: #{tpu_custom_call.1} parent=1 // pred_fallthru
      _
    // Predicated region
    $region14: #{tpu_custom_call.1} parent=1 // pred_check
      _
    $region15: #{tpu_custom_call.1} parent=1 // pred_check_branch
      %42 = sbr.rel (0) target = $region17
    $region16: #{tpu_custom_call.1} parent=1 // pred_region
      %43 = dma.done [#allocation6], 1024
    $region17: #{tpu_custom_call.1} parent=1 // pred_fallthru
      _
    %v45 = vld [vmem:[#allocation2] sm:$0xf]
    %v46 = vld [vmem:[#allocation2 + $0x4] sm:$0xf]
    %v47 = vld [vmem:[#allocation2 + $0x8] sm:$0xf]
    %v48 = vld [vmem:[#allocation2 + $0xc] sm:$0xf]
    %v49 = vld [vmem:[#allocation2 + $0x10] sm:$0xf]
    %v50 = vld [vmem:[#allocation2 + $0x14] sm:$0xf]
    %v51 = vld [vmem:[#allocation2 + $0x18] sm:$0xf]
    %v52 = vld [vmem:[#allocation2 + $0x1c] sm:$0xf]
    %v53 = vld [vmem:[#allocation2 + $0x20] sm:$0xf]
    %v54 = vld [vmem:[#allocation2 + $0x24] sm:$0xf]
    %v55 = vld [vmem:[#allocation2 + $0x28] sm:$0xf]
    %v56 = vld [vmem:[#allocation2 + $0x2c] sm:$0xf]
    %v57 = vld [vmem:[#allocation2 + $0x30] sm:$0xf]
    %v58 = vld [vmem:[#allocation2 + $0x34] sm:$0xf]
    %v59 = vld [vmem:[#allocation2 + $0x38] sm:$0xf]
    %v60 = vld [vmem:[#allocation2 + $0x3c] sm:$0xf]
    %v61 = vld [vmem:[#allocation5] sm:$0xf]
    %v62 = vld [vmem:[#allocation5 + $0x4] sm:$0xf]
    %v63 = vld [vmem:[#allocation5 + $0x8] sm:$0xf]
    %v64 = vld [vmem:[#allocation5 + $0xc] sm:$0xf]
    %v65 = vld [vmem:[#allocation5 + $0x10] sm:$0xf]
    %v66 = vld [vmem:[#allocation5 + $0x14] sm:$0xf]
    %v67 = vld [vmem:[#allocation5 + $0x18] sm:$0xf]
    %v68 = vld [vmem:[#allocation5 + $0x1c] sm:$0xf]
    %v69 = vld [vmem:[#allocation5 + $0x20] sm:$0xf]
    %v70 = vld [vmem:[#allocation5 + $0x24] sm:$0xf]
    %v71 = vld [vmem:[#allocation5 + $0x28] sm:$0xf]
    %v72 = vld [vmem:[#allocation5 + $0x2c] sm:$0xf]
    %v73 = vld [vmem:[#allocation5 + $0x30] sm:$0xf]
    %v74 = vld [vmem:[#allocation5 + $0x34] sm:$0xf]
    %v75 = vld [vmem:[#allocation5 + $0x38] sm:$0xf]
    %v76 = vld [vmem:[#allocation5 + $0x3c] sm:$0xf]
    %v93 = vunpack.c.l.b16 %v45
    %v94 = vunpack.c.l.b16 %v46
    %v95 = vunpack.c.l.b16 %v47
    %v96 = vunpack.c.l.b16 %v48
    %v97 = vunpack.c.l.b16 %v49
    %v98 = vunpack.c.l.b16 %v50
    %v99 = vunpack.c.l.b16 %v51
    %v100 = vunpack.c.l.b16 %v52
    %v101 = vunpack.c.l.b16 %v53
    %v102 = vunpack.c.l.b16 %v54
    %v103 = vunpack.c.l.b16 %v55
    %v104 = vunpack.c.l.b16 %v56
    %v105 = vunpack.c.l.b16 %v57
    %v106 = vunpack.c.l.b16 %v58
    %v107 = vunpack.c.l.b16 %v59
    %v108 = vunpack.c.l.b16 %v60
    %v109 = vpack.c.b16 %v94, %v93
    %v110 = vpack.c.b16 %v96, %v95
    %v111 = vpack.c.b16 %v98, %v97
    %v112 = vpack.c.b16 %v100, %v99
    %v113 = vpack.c.b16 %v102, %v101
    %v114 = vpack.c.b16 %v104, %v103
    %v115 = vpack.c.b16 %v106, %v105
    %v116 = vpack.c.b16 %v108, %v107
    %v141 = vunpack.c.l.b16 %v61
    %v142 = vunpack.c.l.b16 %v62
    %v143 = vunpack.c.l.b16 %v63
    %v144 = vunpack.c.l.b16 %v64
    %v145 = vunpack.c.l.b16 %v65
    %v146 = vunpack.c.l.b16 %v66
    %v147 = vunpack.c.l.b16 %v67
    %v148 = vunpack.c.l.b16 %v68
    %v149 = vunpack.c.l.b16 %v69
    %v150 = vunpack.c.l.b16 %v70
    %v151 = vunpack.c.l.b16 %v71
    %v152 = vunpack.c.l.b16 %v72
    %v153 = vunpack.c.l.b16 %v73
    %v154 = vunpack.c.l.b16 %v74
    %v155 = vunpack.c.l.b16 %v75
    %v156 = vunpack.c.l.b16 %v76
    %v157 = vpack.c.b16 %v142, %v141
    %v158 = vpack.c.b16 %v144, %v143
    %v159 = vpack.c.b16 %v146, %v145
    %v160 = vpack.c.b16 %v148, %v147
    %v161 = vpack.c.b16 %v150, %v149
    %v162 = vpack.c.b16 %v152, %v151
    %v163 = vpack.c.b16 %v154, %v153
    %v164 = vpack.c.b16 %v156, %v155
    %173 = vmatprep.subr.bf16.mxu0 0
    %174 = vmatpush1.bf16.msra.mxu0 %v164
    %175 = vmatprep.subr.bf16.mxu0 0
    %176 = vmatpush1.bf16.msra.mxu0 %v163
    %177 = vmatprep.subr.bf16.mxu0 0
    %178 = vmatpush1.bf16.msra.mxu0 %v162
    %179 = vmatprep.subr.bf16.mxu0 0
    %180 = vmatpush1.bf16.msra.mxu0 %v161
    %181 = vmatprep.subr.bf16.mxu0 0
    %182 = vmatpush1.bf16.msra.mxu0 %v160
    %183 = vmatprep.subr.bf16.mxu0 0
    %184 = vmatpush1.bf16.msra.mxu0 %v159
    %185 = vmatprep.subr.bf16.mxu0 0
    %186 = vmatpush1.bf16.msra.mxu0 %v158
    %187 = vmatprep.subr.bf16.mxu0 0
    %188 = vmatpush1.bf16.msra.mxu0 %v157
    %189 = vmatprep.subr.bf16.mxu0 0
    %190 = vmatpush2.bf16.msra.mxu0 0
    %191 = vmatprep.subr.bf16.mxu0 0
    %192 = vmatpush2.bf16.msra.mxu0 0
    %193 = vmatprep.subr.bf16.mxu0 0
    %194 = vmatpush2.bf16.msra.mxu0 0
    %195 = vmatprep.subr.bf16.mxu0 0
    %196 = vmatpush2.bf16.msra.mxu0 0
    %197 = vmatprep.subr.bf16.mxu0 0
    %198 = vmatpush2.bf16.msra.mxu0 0
    %199 = vmatprep.subr.bf16.mxu0 0
    %200 = vmatpush2.bf16.msra.mxu0 0
    %201 = vmatprep.subr.bf16.mxu0 0
    %202 = vmatpush2.bf16.msra.mxu0 0
    %203 = vmatprep.subr.bf16.mxu0 0
    %204 = vmatpush2.bf16.msra.mxu0 0
    %205 = vmatprep.mubr.bf16.mxu0 0
    %206 = vmatmul.mubr.bf16.gmra.mxu0 %v109
    %v207 = vpop.f32.mrf.mxu0
    %v208 = vadd.f32 0.0, %v207
    %v209 = vpop.f32.mrf.mxu0
    %v210 = vpop.f32.mrf.mxu0
    %v211 = vadd.f32 0.0, %v210
    %v212 = vpop.f32.mrf.mxu0
    %213 = vmatprep.mubr.bf16.mxu0 0
    %214 = vmatmul.mubr.bf16.gmra.mxu0 %v110
    %v215 = vpop.f32.mrf.mxu0
    %v216 = vadd.f32 0.0, %v215
    %v217 = vpop.f32.mrf.mxu0
    %v218 = vpop.f32.mrf.mxu0
    %v219 = vadd.f32 0.0, %v218
    %v220 = vpop.f32.mrf.mxu0
    %221 = vmatprep.mubr.bf16.mxu0 0
    %222 = vmatmul.mubr.bf16.gmra.mxu0 %v111
    %v223 = vpop.f32.mrf.mxu0
    %v224 = vadd.f32 0.0, %v223
    %v225 = vpop.f32.mrf.mxu0
    %v226 = vpop.f32.mrf.mxu0
    %v227 = vadd.f32 0.0, %v226
    %v228 = vpop.f32.mrf.mxu0
    %229 = vmatprep.mubr.bf16.mxu0 0
    %230 = vmatmul.mubr.bf16.gmra.mxu0 %v112
    %v231 = vpop.f32.mrf.mxu0
    %v232 = vadd.f32 0.0, %v231
    %v233 = vpop.f32.mrf.mxu0
    %v234 = vpop.f32.mrf.mxu0
    %v235 = vadd.f32 0.0, %v234
    %v236 = vpop.f32.mrf.mxu0
    %237 = vmatprep.mubr.bf16.mxu0 0
    %238 = vmatmul.mubr.bf16.gmra.mxu0 %v113
    %v239 = vpop.f32.mrf.mxu0
    %v240 = vadd.f32 0.0, %v239
    %v241 = vpop.f32.mrf.mxu0
    %v242 = vpop.f32.mrf.mxu0
    %v243 = vadd.f32 0.0, %v242
    %v244 = vpop.f32.mrf.mxu0
    %245 = vmatprep.mubr.bf16.mxu0 0
    %246 = vmatmul.mubr.bf16.gmra.mxu0 %v114
    %v247 = vpop.f32.mrf.mxu0
    %v248 = vadd.f32 0.0, %v247
    %v249 = vpop.f32.mrf.mxu0
    %v250 = vpop.f32.mrf.mxu0
    %v251 = vadd.f32 0.0, %v250
    %v252 = vpop.f32.mrf.mxu0
    %253 = vmatprep.mubr.bf16.mxu0 0
    %254 = vmatmul.mubr.bf16.gmra.mxu0 %v115
    %v255 = vpop.f32.mrf.mxu0
    %v256 = vadd.f32 0.0, %v255
    %v257 = vpop.f32.mrf.mxu0
    %v258 = vpop.f32.mrf.mxu0
    %v259 = vadd.f32 0.0, %v258
    %v260 = vpop.f32.mrf.mxu0
    %261 = vmatprep.mubr.bf16.mxu0 0
    %262 = vmatmul.mubr.bf16.gmra.mxu0 %v116
    %v263 = vpop.f32.mrf.mxu0
    %v264 = vadd.f32 0.0, %v263
    %v265 = vpop.f32.mrf.mxu0
    %v266 = vpop.f32.mrf.mxu0
    %v267 = vadd.f32 0.0, %v266
    %v268 = vpop.f32.mrf.mxu0
    %269 = vdwg.mxu0
    %270 = vst [vmem:[#allocation7] sm:$0xff] %v208
    %271 = vst [vmem:[#allocation7 + $0x8] sm:$0xff] %v211
    %272 = vst [vmem:[#allocation7 + $0x10] sm:$0xff] %v216
    %273 = vst [vmem:[#allocation7 + $0x18] sm:$0xff] %v219
    %274 = vst [vmem:[#allocation7 + $0x20] sm:$0xff] %v224
    %275 = vst [vmem:[#allocation7 + $0x28] sm:$0xff] %v227
    %276 = vst [vmem:[#allocation7 + $0x30] sm:$0xff] %v232
    %277 = vst [vmem:[#allocation7 + $0x38] sm:$0xff] %v235
    %278 = vst [vmem:[#allocation7 + $0x40] sm:$0xff] %v240
    %279 = vst [vmem:[#allocation7 + $0x48] sm:$0xff] %v243
    %280 = vst [vmem:[#allocation7 + $0x50] sm:$0xff] %v248
    %281 = vst [vmem:[#allocation7 + $0x58] sm:$0xff] %v251
    %282 = vst [vmem:[#allocation7 + $0x60] sm:$0xff] %v256
    %283 = vst [vmem:[#allocation7 + $0x68] sm:$0xff] %v259
    %284 = vst [vmem:[#allocation7 + $0x70] sm:$0xff] %v264
    %285 = vst [vmem:[#allocation7 + $0x78] sm:$0xff] %v267
    %p286 = scmp.eq.s32.totalorder 0, 0
    // Predicated region
    $region18: #{tpu_custom_call.1} parent=1 // pred_check
      %p287 = pneg %p286
    $region19: #{tpu_custom_call.1} parent=1 // pred_check_branch
      %289 = sbr.rel (%p287) target = $region21
    $region20: #{tpu_custom_call.1} parent=1 // pred_region
      %290 = vst [vmem:[#allocation8] sm:$0x1] 0.0
      %291 = vst [vmem:[#allocation10] sm:$0x1] 0.0
    $region21: #{tpu_custom_call.1} parent=1 // pred_fallthru
      _
    %v292 = vld [vmem:[#allocation8] sm:$0x1]
    %v293 = vadd.f32 %v208, %v211
    %v294 = vadd.f32 %v293, %v216
    %v295 = vadd.f32 %v294, %v219
    %v296 = vadd.f32 %v295, %v224
    %v297 = vadd.f32 %v296, %v227
    %v298 = vadd.f32 %v297, %v232
    %v299 = vadd.f32 %v298, %v235
    %v300 = vadd.f32 %v299, %v240
    %v301 = vadd.f32 %v300, %v243
    %v302 = vadd.f32 %v301, %v248
    %v303 = vadd.f32 %v302, %v251
    %v304 = vadd.f32 %v303, %v256
    %v305 = vadd.f32 %v304, %v259
    %v306 = vadd.f32 %v305, %v264
    %v307 = vadd.f32 %v306, %v267
    %v308 = vrot.slane %v307, 4
    %v309 = vadd.f32 %v307, %v308
    %v310 = vrot.slane %v309, 2
    %v311 = vadd.f32 %v309, %v310
    %v312 = vrot.slane %v311, 1
    %v313 = vadd.f32 %v311, %v312
    %v314 = vadd.f32 %v292, %v313
    %315 = vst [vmem:[#allocation8] sm:$0x1] %v314
    %v316 = vld [vmem:[#allocation10] sm:$0x1]
    %v317 = vmul.f32 %v208, %v208
    %v318 = vmul.f32 %v211, %v211
    %v319 = vmul.f32 %v216, %v216
    %v320 = vmul.f32 %v219, %v219
    %v321 = vmul.f32 %v224, %v224
    %v322 = vmul.f32 %v227, %v227
    %v323 = vmul.f32 %v232, %v232
    %v324 = vmul.f32 %v235, %v235
    %v325 = vmul.f32 %v240, %v240
    %v326 = vmul.f32 %v243, %v243
    %v327 = vmul.f32 %v248, %v248
    %v328 = vmul.f32 %v251, %v251
    %v329 = vmul.f32 %v256, %v256
    %v330 = vmul.f32 %v259, %v259
    %v331 = vmul.f32 %v264, %v264
    %v332 = vmul.f32 %v267, %v267
    %v333 = vadd.f32 %v317, %v318
    %v334 = vadd.f32 %v333, %v319
    %v335 = vadd.f32 %v334, %v320
    %v336 = vadd.f32 %v335, %v321
    %v337 = vadd.f32 %v336, %v322
    %v338 = vadd.f32 %v337, %v323
    %v339 = vadd.f32 %v338, %v324
    %v340 = vadd.f32 %v339, %v325
    %v341 = vadd.f32 %v340, %v326
    %v342 = vadd.f32 %v341, %v327
    %v343 = vadd.f32 %v342, %v328
    %v344 = vadd.f32 %v343, %v329
    %v345 = vadd.f32 %v344, %v330
    %v346 = vadd.f32 %v345, %v331
    %v347 = vadd.f32 %v346, %v332
    %v348 = vrot.slane %v347, 4
    %v349 = vadd.f32 %v347, %v348
    %v350 = vrot.slane %v349, 2
    %v351 = vadd.f32 %v349, %v350
    %v352 = vrot.slane %v351, 1
    %v353 = vadd.f32 %v351, %v352
    %v354 = vadd.f32 %v316, %v353
    %355 = vst [vmem:[#allocation10] sm:$0x1] %v354
    // Predicated region
    $region22: #{tpu_custom_call.1} parent=1 // pred_check
      _
    $region23: #{tpu_custom_call.1} parent=1 // pred_check_branch
      %357 = sbr.rel (0) target = $region25
    $region24: #{tpu_custom_call.1} parent=1 // pred_region
      %s359 = ssub.s32 2048, 2048
      %360 = vsyncadd [#allocation4], %s359
      %s361 = sshll.u32 [#allocation7], 4
      %s362 = int_to_ptr.vmem [resolvable:$true] %s361
      %367 = dma.vmem_to_hbm [thread:$0]  %s362, 2048, %s2, [#allocation4], 128, 128, 8
    $region25: #{tpu_custom_call.1} parent=1 // pred_fallthru
      _
    // Predicated region
    $region26: #{tpu_custom_call.1} parent=1 // pred_check
      _
    $region27: #{tpu_custom_call.1} parent=1 // pred_check_branch
      %369 = sbr.rel (0) target = $region29
    $region28: #{tpu_custom_call.1} parent=1 // pred_region
      %s371 = ssub.s32 16, 16
      %372 = vsyncadd [#allocation9], %s371
      %s374 = sshll.u32 [#allocation8], 4
      %s375 = int_to_ptr.vmem [resolvable:$true] %s374
      %377 = dma.vmem_to_hbm [thread:$0]  %s375, 16, %s3, [#allocation9]
    $region29: #{tpu_custom_call.1} parent=1 // pred_fallthru
      _
    // Predicated region
    $region30: #{tpu_custom_call.1} parent=1 // pred_check
      _
    $region31: #{tpu_custom_call.1} parent=1 // pred_check_branch
      %379 = sbr.rel (0) target = $region33
    $region32: #{tpu_custom_call.1} parent=1 // pred_region
      %s381 = ssub.s32 16, 16
      %382 = vsyncadd [#allocation9], %s381
      %s384 = sshll.u32 [#allocation10], 4
      %s385 = int_to_ptr.vmem [resolvable:$true] %s384
      %387 = dma.vmem_to_hbm [thread:$0]  %s385, 16, %s4, [#allocation9]
    $region33: #{tpu_custom_call.1} parent=1 // pred_fallthru
      _
    // Predicated region
    $region34: #{tpu_custom_call.1} parent=1 // pred_check
      _
    $region35: #{tpu_custom_call.1} parent=1 // pred_check_branch
      %389 = sbr.rel (0) target = $region37
    $region36: #{tpu_custom_call.1} parent=1 // pred_region
      %390 = dma.done [#allocation4], 2048
    $region37: #{tpu_custom_call.1} parent=1 // pred_fallthru
      _
    // Predicated region
    $region38: #{tpu_custom_call.1} parent=1 // pred_check
      _
    $region39: #{tpu_custom_call.1} parent=1 // pred_check_branch
      %392 = sbr.rel (0) target = $region41
    $region40: #{tpu_custom_call.1} parent=1 // pred_region
      %393 = dma.done [#allocation9], 16
    $region41: #{tpu_custom_call.1} parent=1 // pred_fallthru
      _
    // Predicated region
    $region42: #{tpu_custom_call.1} parent=1 // pred_check
      _
    $region43: #{tpu_custom_call.1} parent=1 // pred_check_branch
      %395 = sbr.rel (0) target = $region45
    $region44: #{tpu_custom_call.1} parent=1 // pred_region
      %396 = dma.done [#allocation9], 16
    $region45: #{tpu_custom_call.1} parent=1 // pred_fallthru
      _
    %397 = vsyncpa [#allocation3], 1
    %398 = vsyncpa [#allocation6], 1
    %399 = vsyncpa [#allocation4], 1
    %400 = vsyncpa [#allocation9], 1

</llo_original>
